<compile_context>
chip_gen: v7x
topology: tpu7x:2x2x1
jax: 0.10.0
libtpu: 0.0.40
codegen_flags: <defaults>
</compile_context>

<pallas_src>
import functools

import jax
import jax.numpy as jnp
from jax.experimental import pallas as pl
from jax.experimental.pallas import tpu as pltpu


def _aic20_loss_kernel(margin, epsilon, w_trip, w_ce, mxu_dtype,
                       feat_ref, cls_ref, labc_ref, labr_ref, out_ref):
    n, d = feat_ref.shape
    inv_n = jnp.float32(1.0 / n)

    # ----- Triplet loss (batch-hard mining) -----
    # Single MXU Gram matmul (bf16 in / f32 accumulate by default).
    feat_mx = feat_ref[...].astype(mxu_dtype)
    gram = jax.lax.dot_general(
        feat_mx, feat_mx, (((1,), (1,)), ((), ())),
        preferred_element_type=jnp.float32)                         # (N, N) f32

    # Squared norms in f32 straight from feat — no diag mask, no iotas.
    feat32 = feat_ref[...].astype(jnp.float32)
    featsq = feat32 * feat32                                        # (N, D)
    sq_col = jnp.sum(featsq, axis=1, keepdims=True)                 # (N, 1)
    # (1, N) row of norms via a tiny ones-row matvec: avoids a (N,1)->(1,N)
    # transpose relayout and the old masked axis=0 sublane reductions.
    ones_row = jnp.ones((1, d), jnp.float32)
    sq_row = jax.lax.dot_general(
        ones_row, featsq, (((1,), (1,)), ((), ())),
        preferred_element_type=jnp.float32)                         # (1, N)

    dist2 = sq_col + sq_row - 2.0 * gram                            # (N, N)

    # Same-identity mask from int32 label column/row (exact compare).
    same_f = (labc_ref[...] == labr_ref[...]).astype(jnp.float32)   # (N, N)

    # Batch-hard on squared distances (sqrt is monotone). fma-style masking:
    # dist2 >= ~0 and the diagonal is always same-label, so mask-multiply /
    # mask-add-BIG is safe and keeps "no negative in batch" rows finite.
    big = jnp.float32(1e30)
    d2_ap = jnp.max(dist2 * same_f, axis=1, keepdims=True)          # (N, 1)
    d2_an = jnp.min(dist2 + same_f * big, axis=1, keepdims=True)    # (N, 1)
    dist_ap = jnp.sqrt(jnp.maximum(d2_ap, 1e-12))
    dist_an = jnp.sqrt(jnp.maximum(d2_an, 1e-12))
    trip = jnp.sum(jnp.maximum(dist_ap - dist_an + jnp.float32(margin), 0.0)) * inv_n

    # ----- Label-smoothed cross entropy -----
    # Rows of targets sum to 1, so:
    #   ce = (1/N) * (sum_i lse_i - sum_ij targets_ij * logits_ij)
    # No onehot / log_probs (N,C) arrays, no separate picked/sum_logits passes,
    # no materialized f32 copy of the logits block (upcast fused into the ops).
    logits = cls_ref[...]                                           # (N, C) native dtype
    c = logits.shape[1]
    row_max = jnp.max(logits, axis=1, keepdims=True).astype(jnp.float32)   # (N, 1)
    shifted = logits.astype(jnp.float32) - row_max
    lse = jnp.log(jnp.sum(jnp.exp(shifted), axis=1, keepdims=True)) + row_max  # (N, 1)

    cls_iota = jax.lax.broadcasted_iota(jnp.int32, (n, c), 1)
    is_tgt = cls_iota == labc_ref[...]                              # (N, C) bool
    w_uni = jnp.float32(epsilon / c)
    w_hot = jnp.float32(1.0 - epsilon + epsilon / c)
    tgt_logit_sum = jnp.sum(jnp.where(is_tgt, w_hot, w_uni)
                            * logits.astype(jnp.float32))           # scalar
    ce = (jnp.sum(lse) - tgt_logit_sum) * inv_n

    out_ref[0, 0] = jnp.float32(w_trip) * trip + jnp.float32(w_ce) * ce


def aic20_loss(inputs, labels, *, margin=0.3, epsilon=0.1, weights=(1.0, 1.0),
               mxu_dtype=jnp.bfloat16):
    """inputs: dict with 'feat' (N, D) embeddings and 'cls' (N, C) logits."""
    feat = inputs['feat']
    cls = inputs['cls']
    n, d = feat.shape
    c = cls.shape[1]
    lab = labels.astype(jnp.int32)
    lab_col = lab.reshape(n, 1)
    lab_row = lab.reshape(1, n)

    kernel = functools.partial(
        _aic20_loss_kernel, float(margin), float(epsilon),
        float(weights[0]), float(weights[1]), mxu_dtype)

    # Right-size the VMEM budget from the actual shapes: inputs plus the few
    # (N,N)/(N,C) f32 temporaries the single-block path keeps live, 2x headroom,
    # clamped to v7x's 64 MiB physical VMEM.
    live_bytes = (n * d * feat.dtype.itemsize        # feat block
                  + n * c * cls.dtype.itemsize       # logits block
                  + 3 * n * n * 4                    # gram / dist2 / same mask
                  + 2 * n * c * 4                    # CE working set
                  + n * d * 4)                       # featsq
    vmem_limit = int(min(64 * 1024 * 1024, max(4 * 1024 * 1024, 2 * live_bytes)))

    out = pl.pallas_call(
        kernel,
        out_shape=jax.ShapeDtypeStruct((1, 1), jnp.float32),
        in_specs=[
            pl.BlockSpec(memory_space=pltpu.MemorySpace.VMEM),  # feat (N, D)
            pl.BlockSpec(memory_space=pltpu.MemorySpace.VMEM),  # cls logits (N, C)
            pl.BlockSpec(memory_space=pltpu.MemorySpace.VMEM),  # labels (N, 1)
            pl.BlockSpec(memory_space=pltpu.MemorySpace.VMEM),  # labels (1, N)
        ],
        out_specs=pl.BlockSpec(memory_space=pltpu.MemorySpace.SMEM),
        compiler_params=pltpu.CompilerParams(vmem_limit_bytes=vmem_limit),
    )(feat, cls, lab_col, lab_row)
    return out[0, 0]


def _reference_loss(feat, cls, labels, margin=0.3, epsilon=0.1):
    """Pure-JAX reference mirroring the PyTorch formulation."""
    feat = feat.astype(jnp.float32)
    n = feat.shape[0]
    sq = jnp.sum(feat * feat, axis=1, keepdims=True)
    dist = jnp.sqrt(jnp.maximum(sq + sq.T - 2.0 * feat @ feat.T, 1e-12))
    same = labels[:, None] == labels[None, :]
    dist_ap = jnp.max(jnp.where(same, dist, -jnp.inf), axis=1)
    dist_an = jnp.min(jnp.where(same, jnp.inf, dist), axis=1)
    trip = jnp.mean(jnp.maximum(dist_ap - dist_an + margin, 0.0))

    logits = cls.astype(jnp.float32)
    c = logits.shape[1]
    log_probs = jax.nn.log_softmax(logits, axis=1)
    onehot = jax.nn.one_hot(labels, c, dtype=jnp.float32)
    targets = (1.0 - epsilon) * onehot + epsilon / c
    ce = jnp.sum(-targets * log_probs) / n
    return 1.0 * trip + 1.0 * ce


if __name__ == "__main__":
    key = jax.random.PRNGKey(0)
    k1, k2 = jax.random.split(key)

    # Small shapes consistent with the module: batch=8 (4 ids x 2 images),
    # embedding dim=32, num_classes=230 (module default).
    N, D, C = 8, 32, 230
    feat = jax.random.normal(k1, (N, D), dtype=jnp.float32)
    cls_logits = jax.random.normal(k2, (N, C), dtype=jnp.float32)
    labels = jnp.array([0, 0, 1, 1, 2, 2, 3, 3], dtype=jnp.int32)

    inputs = {'feat': feat, 'cls': cls_logits}
    ref = _reference_loss(feat, cls_logits, labels, margin=0.3, epsilon=0.1)

    # Default path: bf16 Gram on the MXU (f32 accumulate, f32 norms) — loose
    # tolerance accounts for the bf16 rounding of the pairwise dot products.
    loss = aic20_loss(inputs, labels, margin=0.3, epsilon=0.1)
    jax.block_until_ready(loss)
    assert jnp.allclose(loss, ref, rtol=1e-2, atol=1e-2), (loss, ref)

    # Full-f32 MXU path matches the reference tightly.
    loss_f32 = aic20_loss(inputs, labels, margin=0.3, epsilon=0.1,
                          mxu_dtype=jnp.float32)
    jax.block_until_ready(loss_f32)
    assert jnp.allclose(loss_f32, ref, rtol=1e-3, atol=1e-3), (loss_f32, ref)

    print("KERNEL_OK")
</pallas_src>

<mosaic_0001>
module attributes {stable_mosaic.version = 11 : i64} {
  func.func @_aic20_loss_kernel(%arg0: memref<8x32xf32, #tpu.memory_space<vmem>>, %arg1: memref<8x230xf32, #tpu.memory_space<vmem>>, %arg2: memref<8x1xi32, #tpu.memory_space<vmem>>, %arg3: memref<1x8xi32, #tpu.memory_space<vmem>>, %arg4: memref<1x1xf32, #tpu.memory_space<smem>>) attributes {dimension_semantics = [], scalar_prefetch = 0 : i64, scratch_operands = 0 : i64, tpu.core_type = #tpu.core_type<tc>} {
    %c0 = arith.constant 0 : index
    %c0_0 = arith.constant 0 : index
    %0 = vector.load %arg0[%c0, %c0_0] : memref<8x32xf32, #tpu.memory_space<vmem>>, vector<8x32xf32>
    %1 = arith.truncf %0 : vector<8x32xf32> to vector<8x32xbf16>
    %cst = arith.constant dense<0.000000e+00> : vector<8x8xf32>
    %2 = tpu.matmul %1, %1, %cst {dimension_numbers = #tpu.dot_dimension_numbers<[1], [1], [0], [0], [0, 0, 1, 0], [], []>} : vector<8x32xbf16>, vector<8x32xbf16>, vector<8x8xf32> -> vector<8x8xf32>
    %c0_1 = arith.constant 0 : index
    %c0_2 = arith.constant 0 : index
    %3 = vector.load %arg0[%c0_1, %c0_2] : memref<8x32xf32, #tpu.memory_space<vmem>>, vector<8x32xf32>
    %4 = arith.mulf %3, %3 : vector<8x32xf32>
    %cst_3 = arith.constant dense<0.000000e+00> : vector<8xf32>
    %5 = vector.multi_reduction <add>, %4, %cst_3 [1] : vector<8x32xf32> to vector<8xf32>
    %6 = vector.shape_cast %5 : vector<8xf32> to vector<8x1xf32>
    %cst_4 = arith.constant 1.000000e+00 : f32
    %7 = vector.broadcast %cst_4 : f32 to vector<1x32xf32>
    %cst_5 = arith.constant dense<0.000000e+00> : vector<1x8xf32>
    %8 = tpu.matmul %7, %4, %cst_5 {dimension_numbers = #tpu.dot_dimension_numbers<[1], [1], [0], [0], [0, 0, 1, 0], [], []>} : vector<1x32xf32>, vector<8x32xf32>, vector<1x8xf32> -> vector<1x8xf32>
    %9 = vector.broadcast %6 : vector<8x1xf32> to vector<8x8xf32>
    %10 = vector.broadcast %8 : vector<1x8xf32> to vector<8x8xf32>
    %11 = arith.addf %9, %10 : vector<8x8xf32>
    %cst_6 = arith.constant 2.000000e+00 : f32
    %12 = vector.broadcast %cst_6 : f32 to vector<8x8xf32>
    %13 = arith.mulf %12, %2 : vector<8x8xf32>
    %14 = arith.subf %11, %13 : vector<8x8xf32>
    %c0_7 = arith.constant 0 : index
    %c0_8 = arith.constant 0 : index
    %15 = vector.load %arg2[%c0_7, %c0_8] : memref<8x1xi32, #tpu.memory_space<vmem>>, vector<8x1xi32>
    %c0_9 = arith.constant 0 : index
    %c0_10 = arith.constant 0 : index
    %16 = vector.load %arg3[%c0_9, %c0_10] : memref<1x8xi32, #tpu.memory_space<vmem>>, vector<1x8xi32>
    %17 = vector.broadcast %15 : vector<8x1xi32> to vector<8x8xi32>
    %18 = vector.broadcast %16 : vector<1x8xi32> to vector<8x8xi32>
    %19 = arith.cmpi eq, %17, %18 : vector<8x8xi32>
    %20 = arith.extui %19 : vector<8x8xi1> to vector<8x8xi32>
    %21 = arith.sitofp %20 : vector<8x8xi32> to vector<8x8xf32>
    %22 = arith.mulf %14, %21 : vector<8x8xf32>
    %cst_11 = arith.constant dense<0xFF800000> : vector<8xf32>
    %23 = vector.multi_reduction <maximumf>, %22, %cst_11 [1] : vector<8x8xf32> to vector<8xf32>
    %24 = vector.shape_cast %23 : vector<8xf32> to vector<8x1xf32>
    %cst_12 = arith.constant 1.000000e+30 : f32
    %25 = vector.broadcast %cst_12 : f32 to vector<8x8xf32>
    %26 = arith.mulf %21, %25 : vector<8x8xf32>
    %27 = arith.addf %14, %26 : vector<8x8xf32>
    %cst_13 = arith.constant dense<0x7F800000> : vector<8xf32>
    %28 = vector.multi_reduction <minimumf>, %27, %cst_13 [1] : vector<8x8xf32> to vector<8xf32>
    %29 = vector.shape_cast %28 : vector<8xf32> to vector<8x1xf32>
    %cst_14 = arith.constant 9.99999996E-13 : f32
    %30 = vector.broadcast %cst_14 : f32 to vector<8x1xf32>
    %31 = arith.maximumf %24, %30 : vector<8x1xf32>
    %32 = math.sqrt %31 : vector<8x1xf32>
    %cst_15 = arith.constant 9.99999996E-13 : f32
    %33 = vector.broadcast %cst_15 : f32 to vector<8x1xf32>
    %34 = arith.maximumf %29, %33 : vector<8x1xf32>
    %35 = math.sqrt %34 : vector<8x1xf32>
    %36 = arith.subf %32, %35 : vector<8x1xf32>
    %cst_16 = arith.constant 3.000000e-01 : f32
    %37 = vector.broadcast %cst_16 : f32 to vector<8x1xf32>
    %38 = arith.addf %36, %37 : vector<8x1xf32>
    %cst_17 = arith.constant 0.000000e+00 : f32
    %39 = vector.broadcast %cst_17 : f32 to vector<8x1xf32>
    %40 = arith.maximumf %38, %39 : vector<8x1xf32>
    %41 = vector.shape_cast %40 : vector<8x1xf32> to vector<1x8x1xf32>
    %cst_18 = arith.constant dense<0.000000e+00> : vector<1xf32>
    %42 = vector.multi_reduction <add>, %41, %cst_18 [1, 2] : vector<1x8x1xf32> to vector<1xf32>
    %43 = vector.shape_cast %42 : vector<1xf32> to vector<1x1x1xf32>
    %44 = vector.extract %43[0, 0, 0] : f32 from vector<1x1x1xf32>
    %cst_19 = arith.constant 1.250000e-01 : f32
    %45 = arith.mulf %44, %cst_19 : f32
    %c0_20 = arith.constant 0 : index
    %c0_21 = arith.constant 0 : index
    %46 = vector.load %arg1[%c0_20, %c0_21] : memref<8x230xf32, #tpu.memory_space<vmem>>, vector<8x230xf32>
    %cst_22 = arith.constant dense<0xFF800000> : vector<8xf32>
    %47 = vector.multi_reduction <maximumf>, %46, %cst_22 [1] : vector<8x230xf32> to vector<8xf32>
    %48 = vector.shape_cast %47 : vector<8xf32> to vector<8x1xf32>
    %49 = vector.broadcast %48 : vector<8x1xf32> to vector<8x230xf32>
    %50 = arith.subf %46, %49 : vector<8x230xf32>
    %51 = math.exp %50 : vector<8x230xf32>
    %cst_23 = arith.constant dense<0.000000e+00> : vector<8xf32>
    %52 = vector.multi_reduction <add>, %51, %cst_23 [1] : vector<8x230xf32> to vector<8xf32>
    %53 = vector.shape_cast %52 : vector<8xf32> to vector<8x1xf32>
    %54 = math.log %53 : vector<8x1xf32>
    %55 = arith.addf %54, %48 : vector<8x1xf32>
    %56 = tpu.iota {dimensions = array<i32: 1>} : vector<8x230xi32>
    %c0_24 = arith.constant 0 : index
    %c0_25 = arith.constant 0 : index
    %57 = vector.load %arg2[%c0_24, %c0_25] : memref<8x1xi32, #tpu.memory_space<vmem>>, vector<8x1xi32>
    %58 = vector.broadcast %57 : vector<8x1xi32> to vector<8x230xi32>
    %59 = arith.cmpi eq, %56, %58 : vector<8x230xi32>
    %cst_26 = arith.constant 0.900434792 : f32
    %cst_27 = arith.constant 4.34782618E-4 : f32
    %60 = vector.broadcast %cst_26 : f32 to vector<8x230xf32>
    %61 = vector.broadcast %cst_27 : f32 to vector<8x230xf32>
    %62 = arith.select %59, %60, %61 : vector<8x230xi1>, vector<8x230xf32>
    %63 = arith.mulf %62, %46 : vector<8x230xf32>
    %64 = vector.shape_cast %63 : vector<8x230xf32> to vector<1x8x230xf32>
    %cst_28 = arith.constant dense<0.000000e+00> : vector<1xf32>
    %65 = vector.multi_reduction <add>, %64, %cst_28 [1, 2] : vector<1x8x230xf32> to vector<1xf32>
    %66 = vector.shape_cast %65 : vector<1xf32> to vector<1x1x1xf32>
    %67 = vector.extract %66[0, 0, 0] : f32 from vector<1x1x1xf32>
    %68 = vector.shape_cast %55 : vector<8x1xf32> to vector<1x8x1xf32>
    %cst_29 = arith.constant dense<0.000000e+00> : vector<1xf32>
    %69 = vector.multi_reduction <add>, %68, %cst_29 [1, 2] : vector<1x8x1xf32> to vector<1xf32>
    %70 = vector.shape_cast %69 : vector<1xf32> to vector<1x1x1xf32>
    %71 = vector.extract %70[0, 0, 0] : f32 from vector<1x1x1xf32>
    %72 = arith.subf %71, %67 : f32
    %cst_30 = arith.constant 1.250000e-01 : f32
    %73 = arith.mulf %72, %cst_30 : f32
    %cst_31 = arith.constant 1.000000e+00 : f32
    %74 = arith.mulf %cst_31, %45 : f32
    %cst_32 = arith.constant 1.000000e+00 : f32
    %75 = arith.mulf %cst_32, %73 : f32
    %76 = arith.addf %74, %75 : f32
    %c0_33 = arith.constant 0 : index
    %c0_34 = arith.constant 0 : index
    %77 = memref.load %arg4[%c0_33, %c0_34] : memref<1x1xf32, #tpu.memory_space<smem>>
    memref.store %76, %arg4[%c0_33, %c0_34] : memref<1x1xf32, #tpu.memory_space<smem>>
    return
  }
}

</mosaic_0001>

<llo_original>
// kernel: tpu_custom_call.1
$region0: #{tpu_custom_call.1}
  #allocation0 [shape = 'u32[]', space=smem, size = 0x4, offset = 0x4, fixed_abs, tag = 'smem constant byte address 0x4 - core index']
  #allocation1 [shape = 'u32[144,128]{1,0:T(1,128)}', space=vmem, size = 0x12000, scoped, tag = 'internal scratch']
  %s0 = inlined_call_operand.vmem [shape: f32[8,32], index: 0, kind: input, shape index: {}]
  %s1 = inlined_call_operand.hbm [shape: f32[8,230], index: 1, kind: input, shape index: {}]
  %s2 = inlined_call_operand.vmem [shape: s32[8,1], index: 2, kind: input, shape index: {}]
  %s3 = inlined_call_operand.vmem [shape: s32[1,8], index: 3, kind: input, shape index: {}]
  %s4 = inlined_call_operand.hbm [shape: f32[1,1], index: 4, kind: output, shape index: {}]
  %s5 = sld [smem:[#allocation0]]
  $region30: #{tpu_custom_call.1} parent=0
    _
  %s7 = ssub.s32 1, %s5
  %s8 = scalar_select 0, %s7, %s5
  $region1: #{tpu_custom_call.1} parent=0
    #allocation2 [shape = 'u8[8192]{0}', space=vmem, size = 0x2000, scoped, tag = 'input window, operand 1, single buffered']
    #allocation3 [shape = 's32[1]{0}', space=sflag, size = 0x4, scoped, tag = 'scoped memory for tpu_custom_call.1']
    #allocation4 [shape = 's32[1]{0}', space=sflag, size = 0x4, scoped, tag = 'scoped memory for tpu_custom_call.1']
    #allocation5 [shape = 'u8[512]{0}', space=smem, size = 0x200, scoped, tag = 'output window, operand 0, single buffered']
    %9 = vsyncpa [#allocation3], 0
    %10 = vsyncpa [#allocation4], 0
    // Predicated region
    $region2: #{tpu_custom_call.1} parent=1 // pred_check
      _
    $region3: #{tpu_custom_call.1} parent=1 // pred_check_branch
      %12 = sbr.rel (0) target = $region5
    $region4: #{tpu_custom_call.1} parent=1 // pred_region
      _
    $region5: #{tpu_custom_call.1} parent=1 // pred_fallthru
      _
    // Predicated region
    $region6: #{tpu_custom_call.1} parent=1 // pred_check
      _
    $region7: #{tpu_custom_call.1} parent=1 // pred_check_branch
      %14 = sbr.rel (0) target = $region9
    $region8: #{tpu_custom_call.1} parent=1 // pred_region
      %s16 = ssub.s32 256, 256
      %17 = vsyncadd [#allocation3], %s16
      %s19 = sshll.u32 [#allocation2], 4
      %s20 = int_to_ptr.vmem [resolvable:$true] %s19
      %22 = dma.hbm_to_vmem [thread:$0]  %s1, 256, %s20, [#allocation3]
    $region9: #{tpu_custom_call.1} parent=1 // pred_fallthru
      _
    // Predicated region
    $region10: #{tpu_custom_call.1} parent=1 // pred_check
      _
    $region11: #{tpu_custom_call.1} parent=1 // pred_check_branch
      %24 = sbr.rel (0) target = $region13
    $region12: #{tpu_custom_call.1} parent=1 // pred_region
      _
    $region13: #{tpu_custom_call.1} parent=1 // pred_fallthru
      _
    // Predicated region
    $region14: #{tpu_custom_call.1} parent=1 // pred_check
      _
    $region15: #{tpu_custom_call.1} parent=1 // pred_check_branch
      %26 = sbr.rel (0) target = $region17
    $region16: #{tpu_custom_call.1} parent=1 // pred_region
      _
    $region17: #{tpu_custom_call.1} parent=1 // pred_fallthru
      _
    // Predicated region
    $region18: #{tpu_custom_call.1} parent=1 // pred_check
      _
    $region19: #{tpu_custom_call.1} parent=1 // pred_check_branch
      %28 = sbr.rel (0) target = $region21
    $region20: #{tpu_custom_call.1} parent=1 // pred_region
      %29 = dma.done [#allocation3], 256
    $region21: #{tpu_custom_call.1} parent=1 // pred_fallthru
      _
    %v31 = vld [vmem:[%s0] sm:$0xff]
    %v32 = vpack.c.bf16 %v31, %v31
    %vm33 = vcmask 261120
    %v35 = vsel %vm33, %v32, 0
    %37 = vmatprep.subr.bf16.mxu0 0
    %38 = vmatpush1.bf16.xpose.msra.mxu0 %v35
    %39 = vmatprep.subr.bf16.mxu0 0
    %40 = vmatpush1.bf16.xpose.msra.mxu0 0
    %41 = vmatprep.subr.bf16.mxu0 0
    %42 = vmatpush1.bf16.xpose.msra.mxu0 0
    %43 = vmatprep.subr.bf16.mxu0 0
    %44 = vmatpush1.bf16.xpose.msra.mxu0 0
    %45 = vmatprep.subr.bf16.mxu0 0
    %46 = vmatpush1.bf16.xpose.msra.mxu0 0
    %47 = vmatprep.subr.bf16.mxu0 0
    %48 = vmatpush1.bf16.xpose.msra.mxu0 0
    %49 = vmatprep.subr.bf16.mxu0 0
    %50 = vmatpush1.bf16.xpose.msra.mxu0 0
    %51 = vmatprep.subr.bf16.mxu0 0
    %52 = vmatpush1.bf16.xpose.msra.mxu0 0
    %53 = vmatprep.subr.bf16.mxu0 0
    %54 = vmatpush1.bf16.xpose.msra.mxu0 0
    %55 = vmatprep.subr.bf16.mxu0 0
    %56 = vmatpush1.bf16.xpose.msra.mxu0 0
    %57 = vmatprep.subr.bf16.mxu0 0
    %58 = vmatpush1.bf16.xpose.msra.mxu0 0
    %59 = vmatprep.subr.bf16.mxu0 0
    %60 = vmatpush1.bf16.xpose.msra.mxu0 0
    %61 = vmatprep.subr.bf16.mxu0 0
    %62 = vmatpush1.bf16.xpose.msra.mxu0 0
    %63 = vmatprep.subr.bf16.mxu0 0
    %64 = vmatpush1.bf16.xpose.msra.mxu0 0
    %65 = vmatprep.subr.bf16.mxu0 0
    %66 = vmatpush1.bf16.xpose.msra.mxu0 0
    %67 = vmatprep.subr.bf16.mxu0 0
    %68 = vmatpush1.bf16.xpose.msra.mxu0 0
    %69 = vmatprep.mubr.bf16.mxu0 0
    %70 = vmatmul.mubr.bf16.gmra.mrb[0].mxu0 %v35
    %v71 = vpop.f32.mrb[0].mxu0
    %v72 = vadd.f32 0.0, %v71
    %v73 = vpop.f32.mrb[0].mxu0
    %v74 = vpop.f32.mrb[0].mxu0
    %v75 = vpop.f32.mrb[0].mxu0
    %76 = vdwg.mxu0
    %v77 = vmul.f32 %v31, %v31
    %v78 = vsel %vm33, %v77, 0.0
    %79 = vadd.xlane.f32.xlu0 %v78
    %v80 = vpop.xlane.xlu0 %79
    %v82 = vsel %vm33, 1.0, 0
    %v85 = vsel %vm33, %v77, 0
    %87 = vmatprep.subr.mxu0 0.0
    %88 = vmatpush1.xpose.msra.mxu0 %v85
    %89 = vmatprep.subr.mxu0 0.0
    %90 = vmatpush1.xpose.msra.mxu0 0.0
    %91 = vmatprep.subr.mxu0 0.0
    %92 = vmatpush1.xpose.msra.mxu0 0.0
    %93 = vmatprep.subr.mxu0 0.0
    %94 = vmatpush1.xpose.msra.mxu0 0.0
    %95 = vmatprep.subr.mxu0 0.0
    %96 = vmatpush1.xpose.msra.mxu0 0.0
    %97 = vmatprep.subr.mxu0 0.0
    %98 = vmatpush1.xpose.msra.mxu0 0.0
    %99 = vmatprep.subr.mxu0 0.0
    %100 = vmatpush1.xpose.msra.mxu0 0.0
    %101 = vmatprep.subr.mxu0 0.0
    %102 = vmatpush1.xpose.msra.mxu0 0.0
    %103 = vmatprep.subr.mxu0 0.0
    %104 = vmatpush1.xpose.msra.mxu0 0.0
    %105 = vmatprep.subr.mxu0 0.0
    %106 = vmatpush1.xpose.msra.mxu0 0.0
    %107 = vmatprep.subr.mxu0 0.0
    %108 = vmatpush1.xpose.msra.mxu0 0.0
    %109 = vmatprep.subr.mxu0 0.0
    %110 = vmatpush1.xpose.msra.mxu0 0.0
    %111 = vmatprep.subr.mxu0 0.0
    %112 = vmatpush1.xpose.msra.mxu0 0.0
    %113 = vmatprep.subr.mxu0 0.0
    %114 = vmatpush1.xpose.msra.mxu0 0.0
    %115 = vmatprep.subr.mxu0 0.0
    %116 = vmatpush1.xpose.msra.mxu0 0.0
    %117 = vmatprep.subr.mxu0 0.0
    %118 = vmatpush1.xpose.msra.mxu0 0.0
    %119 = vmatprep.subr.mxu0 0.0
    %120 = vmatpush1.xpose.msra.mxu0 0.0
    %121 = vmatprep.subr.mxu0 0.0
    %122 = vmatpush1.xpose.msra.mxu0 0.0
    %123 = vmatprep.subr.mxu0 0.0
    %124 = vmatpush1.xpose.msra.mxu0 0.0
    %125 = vmatprep.subr.mxu0 0.0
    %126 = vmatpush1.xpose.msra.mxu0 0.0
    %127 = vmatprep.subr.mxu0 0.0
    %128 = vmatpush1.xpose.msra.mxu0 0.0
    %129 = vmatprep.subr.mxu0 0.0
    %130 = vmatpush1.xpose.msra.mxu0 0.0
    %131 = vmatprep.subr.mxu0 0.0
    %132 = vmatpush1.xpose.msra.mxu0 0.0
    %133 = vmatprep.subr.mxu0 0.0
    %134 = vmatpush1.xpose.msra.mxu0 0.0
    %135 = vmatprep.subr.mxu0 0.0
    %136 = vmatpush1.xpose.msra.mxu0 0.0
    %137 = vmatprep.subr.mxu0 0.0
    %138 = vmatpush1.xpose.msra.mxu0 0.0
    %139 = vmatprep.subr.mxu0 0.0
    %140 = vmatpush1.xpose.msra.mxu0 0.0
    %141 = vmatprep.subr.mxu0 0.0
    %142 = vmatpush1.xpose.msra.mxu0 0.0
    %143 = vmatprep.subr.mxu0 0.0
    %144 = vmatpush1.xpose.msra.mxu0 0.0
    %145 = vmatprep.subr.mxu0 0.0
    %146 = vmatpush1.xpose.msra.mxu0 0.0
    %147 = vmatprep.subr.mxu0 0.0
    %148 = vmatpush1.xpose.msra.mxu0 0.0
    %149 = vmatprep.subr.mxu0 0.0
    %150 = vmatpush1.xpose.msra.mxu0 0.0
    %151 = vmatprep.mubr.f32.mxu0 0.0
    %152 = vmatmul.mubr.f32.gmra.mrb[0].mxu0 %v82
    %v153 = vpop.f32.mrb[0].mxu0
    %v154 = vadd.f32 0.0, %v153
    %v155 = vpop.f32.mrb[0].mxu0
    %156 = vdwg.mxu0
    %v157 = vlaneseq
    %v158 = vshrl.u32 %v157, 7
    %v159 = vsub.s32 0, %v158
    %v160 = vrot.slane %v154, %v159
    %v161 = vadd.f32 %v80, %v160
    %v162 = vmul.f32 %v72, 2.0
    %v163 = vsub.f32 %v161, %v162
    %v164 = vld [vmem:[%s2] sm:$0xff]
    %v165 = vld [vmem:[%s3] sm:$0x1]
    %166 = vset.pattern.permute.xlu0 0
    %167 = vperm.xlu0 %166, %v164
    %v168 = vpop.permute.xlu0 %167
    %v169 = vlaneseq
    %v170 = vshrl.u32 %v169, 7
    %v171 = vsub.s32 0, %v170
    %v172 = vrot.slane %v165, %v171
    %vm173 = vcmp.eq.s32.totalorder %v168, %v172
    %v174 = vsel %vm173, 1, 0
    %v175 = vcvt.s32.f32 %v174
    %v176 = vmul.f32 %v163, %v175
    %vm177 = vcmask 64512
    %v178 = vsel %vm177, %v176, -inf
    %179 = vmax.xlane.f32.xlu0 %v178
    %v180 = vpop.xlane.xlu0 %179
    %v181 = vmul.f32 %v175, 1e+30
    %v182 = vadd.f32 %v163, %v181
    %v183 = vsel %vm177, %v182, inf
    %184 = vmin.xlane.f32.xlu0 %v183
    %v185 = vpop.xlane.xlu0 %184
    %v186 = vmax.f32 %v180, 1e-12
    %v187 = vrsqrt.pop %v186
    %v188 = vmul.f32 %v186, %v187
    %vm189 = vcmp.eq.f32.partialorder %v186, inf
    %v190 = vsel %vm189, %v186, %v188
    %vm191 = vcmp.eq.f32.partialorder %v186, 0.0
    %v192 = vand.u32 %v186, 2147483648
    %v193 = vsel %vm191, %v192, %v190
    %v194 = vmax.f32 %v185, 1e-12
    %v195 = vrsqrt.pop %v194
    %v196 = vmul.f32 %v194, %v195
    %vm197 = vcmp.eq.f32.partialorder %v194, inf
    %v198 = vsel %vm197, %v194, %v196
    %vm199 = vcmp.eq.f32.partialorder %v194, 0.0
    %v200 = vand.u32 %v194, 2147483648
    %v201 = vsel %vm199, %v200, %v198
    %v202 = vsub.f32 %v193, %v201
    %v203 = vadd.f32 %v202, 0.3
    %v204 = vmax.f32 %v203, 0.0
    %vm205 = vcmask 7168
    %v206 = vsel %vm205, %v204, 0.0
    %207 = vadd.xlane.f32.xlu0 %v206
    %v208 = vpop.xlane.xlu0 %207
    %v209 = vrot.slane %v208, 4
    %v210 = vadd.f32 %v208, %v209
    %v211 = vrot.slane %v210, 2
    %v212 = vadd.f32 %v210, %v211
    %v213 = vrot.slane %v212, 1
    %v214 = vadd.f32 %v212, %v213
    %s215 = vtos %v214
    %s216 = smul.f32 %s215, 0.125
    %v217 = vld [vmem:[#allocation2] sm:$0xff]
    %v218 = vld [vmem:[#allocation2 + $0x8] sm:$0xff]
    %vm219 = vcmask 834560
    %v220 = vsel %vm219, %v218, -inf
    %v221 = vmax.f32 %v217, %v220
    %222 = vmax.xlane.f32.xlu0 %v221
    %v223 = vpop.xlane.xlu0 %222
    %v224 = vsub.f32 %v217, %v223
    %v225 = vsub.f32 %v218, %v223
    %v226 = vmul.f32 %v224, 1.442695
    %v227 = vpow.pop %v226
    %v228 = vmul.f32 %v225, 1.442695
    %v229 = vpow.pop %v228
    %v230 = vsel %vm219, %v229, 0.0
    %v231 = vadd.f32 %v227, %v230
    %232 = vadd.xlane.f32.xlu0 %v231
    %v233 = vpop.xlane.xlu0 %232
    %v234 = vlog2.pop %v233
    %v235 = vmul.f32 %v234, 0.6931472
    %v236 = vadd.f32 %v235, %v223
    %v237 = vlaneseq
    %v238 = vand.u32 %v237, 127
    %v239 = vadd.s32 %v238, 128
    %vm240 = vcmp.eq.s32.totalorder %v238, %v168
    %vm241 = vcmp.eq.s32.totalorder %v239, %v168
    %v242 = vsel %vm240, 0.9004348, 0.00043478262
    %v243 = vsel %vm241, 0.9004348, 0.00043478262
    %v244 = vmul.f32 %v242, %v217
    %v245 = vmul.f32 %v243, %v218
    %v246 = vsel %vm219, %v245, 0.0
    %v247 = vadd.f32 %v244, %v246
    %248 = vadd.xlane.f32.xlu0 %v247
    %v249 = vpop.xlane.xlu0 %248
    %v250 = vrot.slane %v249, 4
    %v251 = vadd.f32 %v249, %v250
    %v252 = vrot.slane %v251, 2
    %v253 = vadd.f32 %v251, %v252
    %v254 = vrot.slane %v253, 1
    %v255 = vadd.f32 %v253, %v254
    %s256 = vtos %v255
    %v257 = vsel %vm205, %v236, 0.0
    %258 = vadd.xlane.f32.xlu0 %v257
    %v259 = vpop.xlane.xlu0 %258
    %v260 = vrot.slane %v259, 4
    %v261 = vadd.f32 %v259, %v260
    %v262 = vrot.slane %v261, 2
    %v263 = vadd.f32 %v261, %v262
    %v264 = vrot.slane %v263, 1
    %v265 = vadd.f32 %v263, %v264
    %s266 = vtos %v265
    %s267 = ssub.f32 %s266, %s256
    %s268 = smul.f32 %s267, 0.125
    %s269 = sadd.f32 %s216, %s268
    %s270 = scalar_lea.smem [#allocation5], 0
    %271 = sst [smem:[%s270]] %s269
    // Predicated region
    $region22: #{tpu_custom_call.1} parent=1 // pred_check
      _
    $region23: #{tpu_custom_call.1} parent=1 // pred_check_branch
      %273 = sbr.rel (0) target = $region25
    $region24: #{tpu_custom_call.1} parent=1 // pred_region
      %s275 = ssub.s32 16, 16
      %276 = vsyncadd [#allocation4], %s275
      %279 = dma.smem_to_hbm [#allocation5], 16, %s4, [#allocation4]
    $region25: #{tpu_custom_call.1} parent=1 // pred_fallthru
      _
    // Predicated region
    $region26: #{tpu_custom_call.1} parent=1 // pred_check
      _
    $region27: #{tpu_custom_call.1} parent=1 // pred_check_branch
      %281 = sbr.rel (0) target = $region29
    $region28: #{tpu_custom_call.1} parent=1 // pred_region
      %282 = dma.done [#allocation4], 16
    $region29: #{tpu_custom_call.1} parent=1 // pred_fallthru
      _
    %283 = sfence
    %284 = vsyncpa [#allocation3], 1
    %285 = vsyncpa [#allocation4], 1

</llo_original>
